<compile_context>
chip_gen: v7x
topology: tpu7x:2x2x1
jax: 0.10.0
libtpu: 0.0.40
codegen_flags: <defaults>
</compile_context>

<pallas_src>
import jax
import jax.numpy as jnp
from jax.experimental import pallas as pl
from jax.experimental.pallas import tpu as pltpu

_MiB = 1024 * 1024
_MAX_TILE_ROWS = 1024          # row-tile returns flatten past ~85% of HBM roofline
_MAX_CHUNK_ROWS = 256          # in-kernel compute chunk cap (rows)
_CHUNK_F32_BUDGET_BYTES = 2 * _MiB   # target bytes per live f32 temp inside the kernel


def _sublane_multiple(dtype) -> int:
    itemsize = jnp.dtype(dtype).itemsize
    if itemsize >= 4:
        return 8
    if itemsize == 2:
        return 16
    return 32


def _vmem_budgets():
    """(buffer_budget_bytes, vmem_limit_bytes) derived from the chip generation."""
    cap = None
    try:
        cap = int(pltpu.get_tpu_info().vmem_capacity_bytes)
    except Exception:
        cap = None
    if cap is None or cap <= 64 * _MiB:
        # v7x-class (64 MiB VMEM per TC) or unknown: stay conservative, leave
        # headroom for the resident weight, semaphores and Mosaic scratch.
        return 36 * _MiB, 52 * _MiB
    # v5e / v6e class (128 MiB VMEM): spend the extra room on bigger DMA tiles.
    return 88 * _MiB, 112 * _MiB


def _rmsnorm_kernel(x_ref, w_ref, o_ref, *, eps: float, add_unit_offset: bool,
                    chunk_rows: int):
    # x_ref: (tile_rows, dim), w_ref: (1, dim), o_ref: (tile_rows, dim)
    # Weight scale: computed once per block; weight row is resident in VMEM.
    w = w_ref[...].astype(jnp.float32)
    scale = (1.0 + w) if add_unit_offset else w

    tile_rows = x_ref.shape[0]
    num_chunks = tile_rows // chunk_rows   # exact by construction in the wrapper

    def process(c):
        r0 = c * chunk_rows
        if not isinstance(r0, int):
            r0 = pl.multiple_of(r0, chunk_rows)
        x = x_ref[pl.ds(r0, chunk_rows), :]
        xf = x.astype(jnp.float32)                           # x.float()
        ms = jnp.mean(xf * xf, axis=-1, keepdims=True)       # pow(2).mean(-1, keepdim)
        normed = xf * jax.lax.rsqrt(ms + eps)                # * rsqrt(mean + eps)
        normed = normed.astype(x.dtype)                      # .type_as(x)
        o_ref[pl.ds(r0, chunk_rows), :] = (
            normed.astype(jnp.float32) * scale).astype(o_ref.dtype)

    if num_chunks == 1:
        process(0)
    else:
        def body(c, carry):
            process(c)
            return carry
        jax.lax.fori_loop(0, num_chunks, body, 0, unroll=num_chunks <= 8)


def rms_norm(x, weight, *, eps: float = 1e-6, add_unit_offset: bool = True,
             tile_rows: int | None = None, chunk_rows: int | None = None):
    """RMSNorm over the last axis of x, scale parameter `weight` of shape (dim,)."""
    orig_shape = x.shape
    dim = orig_shape[-1]
    rows = 1
    for s in orig_shape[:-1]:
        rows *= s
    x2d = x.reshape(rows, dim)
    w2d = weight.reshape(1, dim)

    itemsize = jnp.dtype(x.dtype).itemsize
    sub = _sublane_multiple(x.dtype)
    buffer_budget, vmem_limit = _vmem_budgets()

    # --- in-kernel compute chunk: bound live f32 intermediates -----------------
    if chunk_rows is None:
        chunk_rows = _CHUNK_F32_BUDGET_BYTES // max(1, dim * 4)
    chunk_rows = max(sub, min(_MAX_CHUNK_ROWS, (chunk_rows // sub) * sub))
    # ~3 live f32 arrays of (chunk_rows, dim) inside the kernel (xf, normed, scaled)
    f32_scratch = 3 * chunk_rows * dim * 4

    # --- DMA row tile: double-buffered x + out, minus in-kernel f32 scratch ----
    if tile_rows is None:
        budget_rows = max(0, buffer_budget - f32_scratch) // max(1, 4 * dim * itemsize)
        tile_rows = min(max(sub, budget_rows), _MAX_TILE_ROWS)

    # Align to sublane packing (8 f32 / 16 bf16 / 32 int8-fp8).
    tile_rows = max(sub, (tile_rows // sub) * sub)

    # Never larger than needed.
    rows_padded = ((rows + sub - 1) // sub) * sub
    tile_rows = min(tile_rows, rows_padded)

    # v7x megacore: guarantee >= 2 grid steps whenever there is enough work, so
    # both TensorCores get a share (neutral on 1-TC v5e/v6e).
    if rows > sub:
        half = (((rows + 1) // 2 + sub - 1) // sub) * sub
        tile_rows = min(tile_rows, max(sub, half))

    # Make the in-kernel chunk loop exact (tile is a whole number of chunks).
    if tile_rows <= chunk_rows:
        chunk_rows = tile_rows
    else:
        tile_rows = (tile_rows // chunk_rows) * chunk_rows

    grid = (pl.cdiv(rows, tile_rows),)   # ragged last block handled by Pallas

    kernel = lambda x_ref, w_ref, o_ref: _rmsnorm_kernel(
        x_ref, w_ref, o_ref, eps=eps, add_unit_offset=add_unit_offset,
        chunk_rows=chunk_rows)

    out2d = pl.pallas_call(
        kernel,
        out_shape=jax.ShapeDtypeStruct((rows, dim), x.dtype),
        grid_spec=pltpu.PrefetchScalarGridSpec(
            num_scalar_prefetch=0,
            grid=grid,
            in_specs=[
                pl.BlockSpec((tile_rows, dim), lambda i: (i, 0)),  # x row tile
                pl.BlockSpec((1, dim), lambda i: (0, 0)),          # weight (resident)
            ],
            out_specs=pl.BlockSpec((tile_rows, dim), lambda i: (i, 0)),
        ),
        compiler_params=pltpu.CompilerParams(
            dimension_semantics=("parallel",),
            vmem_limit_bytes=vmem_limit),
    )(x2d, w2d)

    return out2d.reshape(orig_shape)


def rms_norm_ref(x, weight, *, eps: float = 1e-6, add_unit_offset: bool = True):
    xf = x.astype(jnp.float32)
    normed = xf * jax.lax.rsqrt(jnp.mean(xf * xf, axis=-1, keepdims=True) + eps)
    normed = normed.astype(x.dtype)
    scale = (1.0 + weight.astype(jnp.float32)) if add_unit_offset else weight.astype(jnp.float32)
    return (normed.astype(jnp.float32) * scale).astype(x.dtype)


if __name__ == "__main__":
    key = jax.random.PRNGKey(0)
    kx, kw, kx2, kx3, kx4, kw4 = jax.random.split(key, 6)

    batch, seq, hidden = 2, 8, 32        # x: (2, 8, 32), weight: (32,)
    # nn.Parameter(torch.zeros(dim)) has shape (dim,); use small random values
    # so the (1 + weight) scale is exercised non-trivially.
    weight = 0.1 * jax.random.normal(kw, (hidden,), dtype=jnp.float32)

    # Case 1: f32, default (auto) tile selection; rows > sublane -> >= 2 grid steps.
    x = jax.random.normal(kx, (batch, seq, hidden), dtype=jnp.float32)
    out = jax.block_until_ready(rms_norm(x, weight, eps=1e-6, add_unit_offset=True))
    ref = rms_norm_ref(x, weight, eps=1e-6, add_unit_offset=True)
    assert out.shape == x.shape and out.dtype == x.dtype
    assert jnp.allclose(out, ref, atol=1e-5, rtol=1e-5), "f32 mismatch vs reference"

    # Case 2: row count not divisible by the tile -> exercises cdiv / ragged block.
    x_ragged = jax.random.normal(kx2, (2, 7, hidden), dtype=jnp.float32)
    out_r = jax.block_until_ready(rms_norm(x_ragged, weight, tile_rows=8))
    ref_r = rms_norm_ref(x_ragged, weight)
    assert jnp.allclose(out_r, ref_r, atol=1e-5, rtol=1e-5), "ragged mismatch vs reference"

    # Case 3: bf16 input -> exercises sublane=16 alignment and type_as rounding.
    x_bf16 = jax.random.normal(kx3, (batch, seq, hidden), dtype=jnp.float32).astype(jnp.bfloat16)
    w_bf16 = weight.astype(jnp.bfloat16)
    out_b = jax.block_until_ready(rms_norm(x_bf16, w_bf16))
    ref_b = rms_norm_ref(x_bf16, w_bf16)
    assert out_b.dtype == jnp.bfloat16
    assert jnp.allclose(out_b.astype(jnp.float32), ref_b.astype(jnp.float32),
                        atol=2e-2, rtol=2e-2), "bf16 mismatch vs reference"

    # Case 4: lane-dense dim (128) with enough rows to exercise the in-kernel
    # chunked fori_loop (tile_rows > chunk_rows) and the >=2-grid-step cap.
    x_big = jax.random.normal(kx4, (2, 512, 128), dtype=jnp.float32)
    w_big = 0.1 * jax.random.normal(kw4, (128,), dtype=jnp.float32)
    out_big = jax.block_until_ready(rms_norm(x_big, w_big, chunk_rows=256))
    ref_big = rms_norm_ref(x_big, w_big)
    assert jnp.allclose(out_big, ref_big, atol=1e-5, rtol=1e-5), "chunked mismatch vs reference"

    print("KERNEL_OK")
</pallas_src>

<mosaic_0001>
module attributes {stable_mosaic.version = 11 : i64} {
  func.func @_lambda_(%arg0: i32, %arg1: memref<8x32xf32, #tpu.memory_space<vmem>>, %arg2: memref<1x32xf32, #tpu.memory_space<vmem>>, %arg3: memref<8x32xf32, #tpu.memory_space<vmem>>) attributes {dimension_semantics = [#tpu.dimension_semantics<parallel>], iteration_bounds = array<i64: 2>, scalar_prefetch = 0 : i64, scratch_operands = 0 : i64, tpu.core_type = #tpu.core_type<tc>, window_params = [{transform_indices = @transform_0, window_bounds = array<i64: 8, 32>}, {pipeline_mode = #tpu.pipeline_mode<synchronous>, transform_indices = @transform_1, window_bounds = array<i64: 1, 32>}, {transform_indices = @transform_2, window_bounds = array<i64: 8, 32>}]} {
    %c0 = arith.constant 0 : index
    %c0_0 = arith.constant 0 : index
    %0 = vector.load %arg2[%c0, %c0_0] : memref<1x32xf32, #tpu.memory_space<vmem>>, vector<1x32xf32>
    %cst = arith.constant 1.000000e+00 : f32
    %1 = vector.broadcast %cst : f32 to vector<1x32xf32>
    %2 = arith.addf %1, %0 : vector<1x32xf32>
    %c0_1 = arith.constant 0 : index
    %c0_2 = arith.constant 0 : index
    %3 = vector.load %arg1[%c0_1, %c0_2] : memref<8x32xf32, #tpu.memory_space<vmem>>, vector<8x32xf32>
    %4 = arith.mulf %3, %3 : vector<8x32xf32>
    %cst_3 = arith.constant dense<0.000000e+00> : vector<8xf32>
    %5 = vector.multi_reduction <add>, %4, %cst_3 [1] : vector<8x32xf32> to vector<8xf32>
    %6 = vector.shape_cast %5 : vector<8xf32> to vector<8x1xf32>
    %cst_4 = arith.constant 3.200000e+01 : f32
    %7 = vector.broadcast %cst_4 : f32 to vector<8x1xf32>
    %8 = arith.divf %6, %7 : vector<8x1xf32>
    %cst_5 = arith.constant 9.99999997E-7 : f32
    %9 = vector.broadcast %cst_5 : f32 to vector<8x1xf32>
    %10 = arith.addf %8, %9 : vector<8x1xf32>
    %11 = math.rsqrt %10 : vector<8x1xf32>
    %12 = vector.broadcast %11 : vector<8x1xf32> to vector<8x32xf32>
    %13 = arith.mulf %3, %12 : vector<8x32xf32>
    %14 = vector.broadcast %2 : vector<1x32xf32> to vector<8x32xf32>
    %15 = arith.mulf %13, %14 : vector<8x32xf32>
    %c0_6 = arith.constant 0 : index
    %c0_7 = arith.constant 0 : index
    %16 = vector.load %arg3[%c0_6, %c0_7] : memref<8x32xf32, #tpu.memory_space<vmem>>, vector<8x32xf32>
    tpu.vector_store %arg3[%c0_6, %c0_7], %15 {strides = array<i32>} : memref<8x32xf32, #tpu.memory_space<vmem>>, vector<8x32xf32>,
    return
  }
  func.func @transform_0(%arg0: i32) -> (i32, i32) {
    %c0_i32 = arith.constant 0 : i32
    %c0_i32_0 = arith.constant 0 : i32
    return %arg0, %c0_i32 : i32, i32
  }
  func.func @transform_1(%arg0: i32) -> (i32, i32) {
    %c0_i32 = arith.constant 0 : i32
    %c0_i32_0 = arith.constant 0 : i32
    %c0_i32_1 = arith.constant 0 : i32
    return %c0_i32, %c0_i32_0 : i32, i32
  }
  func.func @transform_2(%arg0: i32) -> (i32, i32) {
    %c0_i32 = arith.constant 0 : i32
    %c0_i32_0 = arith.constant 0 : i32
    return %arg0, %c0_i32 : i32, i32
  }
}

</mosaic_0001>

<llo_original>
// kernel: tpu_custom_call.1
$region0: #{tpu_custom_call.1}
  #allocation0 [shape = 'u32[]', space=smem, size = 0x4, offset = 0x4, fixed_abs, tag = 'smem constant byte address 0x4 - core index']
  #allocation1 [shape = 'u32[144,128]{1,0:T(1,128)}', space=vmem, size = 0x12000, scoped, tag = 'internal scratch']
  %s0 = inlined_call_operand.hbm [shape: f32[16,32], index: 0, kind: input, shape index: {}]
  %s1 = inlined_call_operand.vmem [shape: f32[1,32], index: 1, kind: input, shape index: {}]
  %s2 = inlined_call_operand.hbm [shape: f32[16,32], index: 2, kind: output, shape index: {}]
  %s3 = sld [smem:[#allocation0]]
  $region45: #{tpu_custom_call.1} parent=0
    _
  %s5 = ssub.s32 1, %s3
  %s6 = scalar_select 0, %s5, %s3
  $region1: #{tpu_custom_call.1} parent=0
    #allocation2 [shape = 'u8[8192]{0}', space=vmem, size = 0x2000, scoped, tag = 'input window, operand 0']
    #allocation3 [shape = 's32[2]{0}', space=sflag, size = 0x8, scoped, tag = 'scoped memory for tpu_custom_call.1']
    #allocation4 [shape = 's32[2]{0}', space=sflag, size = 0x8, scoped, tag = 'scoped memory for tpu_custom_call.1']
    #allocation5 [shape = 'u8[8192]{0}', space=vmem, size = 0x2000, scoped, tag = 'output window, operand 0']
    %7 = vsyncpa [#allocation3], 0
    %s8 = scalar_lea.sflag [#allocation3], 1
    %9 = vsyncpa %s8, 0
    %10 = vsyncpa [#allocation4], 0
    %s11 = scalar_lea.sflag [#allocation4], 1
    %12 = vsyncpa %s11, 0
    loop: start=0, step=1, limit=4
    $region2: #{tpu_custom_call.1} parent=1 // loop_pre_header
      _
    $region3: #{tpu_custom_call.1} parent=1 // loop_header
      %s14 = sphi 0, %s18
      %p15 = scmp.ge.s32.totalorder %s14, 4
      %s24 = sphi 0, %s26
      %s27 = sphi 0, %s24
      %s28 = sphi 0, %s27
      %s44 = sphi 0, %s28
      %s48 = sphi 0, %s48
      %s50 = sphi 0, %s48
      %s51 = sphi 0, %s50
      %s65 = sphi 0, %s51
      %s71 = sphi 0, %s73
      %s74 = sphi 0, %s71
      %s75 = sphi 0, %s74
      %s91 = sphi 0, %s75
    $region4: #{tpu_custom_call.1} parent=1 // loop_header_branch
      %17 = sbr.rel (%p15) target = $region8
    $region5: #{tpu_custom_call.1} parent=1 // loop_body
      %s19 = ssub.s32 %s14, 1
      %s20 = ssub.s32 %s14, 2
      %s21 = sadd.s32 %s14, 1
      %s22 = ssub.s32 %s14, %s21
      %p23 = scmp.eq.s32.totalorder %s22, 0
      %s25 = sadd.s32 %s24, 1
      %s26 = scalar_select %p23, %s24, %s25
      %p29 = pneg %p23
      %p30 = scmp.eq.s32.totalorder %s14, 1
      %p31 = por %p29, %p30
      %p32 = scmp.ne.s32.totalorder %s24, %s27
      %p33 = scmp.eq.s32.totalorder %s14, 0
      %p34 = por %p32, %p33
      %p35 = scmp.ne.s32.totalorder %s24, %s27
      %p36 = scmp.eq.s32.totalorder %s19, 1
      %p37 = por %p35, %p36
      %p38 = scmp.ne.s32.totalorder %s27, %s28
      %p39 = scmp.eq.s32.totalorder %s19, 0
      %p40 = por %p38, %p39
      %p41 = scmp.ne.s32.totalorder %s27, %s28
      %p42 = scmp.eq.s32.totalorder %s20, 1
      %p43 = por %p41, %p42
      %p45 = scmp.ne.s32.totalorder %s28, %s44
      %p46 = scmp.eq.s32.totalorder %s20, 0
      %p47 = por %p45, %p46
      %s49 = sadd.s32 %s48, 1
      %p52 = scmp.eq.s32.totalorder %s14, 1
      %p53 = scmp.ne.s32.totalorder %s48, %s50
      %p54 = scmp.eq.s32.totalorder %s14, 0
      %p55 = por %p53, %p54
      %p56 = scmp.ne.s32.totalorder %s48, %s50
      %p57 = scmp.eq.s32.totalorder %s19, 1
      %p58 = por %p56, %p57
      %p59 = scmp.ne.s32.totalorder %s50, %s51
      %p60 = scmp.eq.s32.totalorder %s19, 0
      %p61 = por %p59, %p60
      %p62 = scmp.ne.s32.totalorder %s50, %s51
      %p63 = scmp.eq.s32.totalorder %s20, 1
      %p64 = por %p62, %p63
      %p66 = scmp.ne.s32.totalorder %s51, %s65
      %p67 = scmp.eq.s32.totalorder %s20, 0
      %p68 = por %p66, %p67
      %s69 = ssub.s32 %s14, %s21
      %p70 = scmp.eq.s32.totalorder %s69, 0
      %s72 = sadd.s32 %s71, 1
      %s73 = scalar_select %p70, %s71, %s72
      %p76 = pneg %p70
      %p77 = scmp.eq.s32.totalorder %s14, 1
      %p78 = por %p76, %p77
      %p79 = scmp.ne.s32.totalorder %s71, %s74
      %p80 = scmp.eq.s32.totalorder %s14, 0
      %p81 = por %p79, %p80
      %p82 = scmp.ne.s32.totalorder %s71, %s74
      %p83 = scmp.eq.s32.totalorder %s19, 1
      %p84 = por %p82, %p83
      %p85 = scmp.ne.s32.totalorder %s74, %s75
      %p86 = scmp.eq.s32.totalorder %s19, 0
      %p87 = por %p85, %p86
      %p88 = scmp.ne.s32.totalorder %s74, %s75
      %p89 = scmp.eq.s32.totalorder %s20, 1
      %p90 = por %p88, %p89
      %p92 = scmp.ne.s32.totalorder %s75, %s91
      %p93 = scmp.eq.s32.totalorder %s20, 0
      %p94 = por %p92, %p93
      %p95 = scmp.le.s32.totalorder 1, %s14
      %p96 = scmp.lt.s32.totalorder %s14, 3
      %p97 = pnand %p95, %p96
      %p98 = pneg %p97
      // Predicated region
      $region9: #{tpu_custom_call.1} parent=5 // pred_check
        _
      $region10: #{tpu_custom_call.1} parent=5 // pred_check_branch
        %100 = sbr.rel (%p97) target = $region12
      $region11: #{tpu_custom_call.1} parent=5 // pred_region
        %s101 = ssub.s32 %s14, 1
        // Predicated region
        $region13: #{tpu_custom_call.1} parent=11 // pred_check
          %p102 = pneg %p61
        $region14: #{tpu_custom_call.1} parent=11 // pred_check_branch
          %104 = sbr.rel (%p102) target = $region16
        $region15: #{tpu_custom_call.1} parent=11 // pred_region
          _
        $region16: #{tpu_custom_call.1} parent=11 // pred_fallthru
          _
      $region12: #{tpu_custom_call.1} parent=5 // pred_fallthru
        _
      %p105 = scmp.lt.s32.totalorder %s14, 2
      // Predicated region
      $region17: #{tpu_custom_call.1} parent=5 // pred_check
        %p106 = pneg %p105
      $region18: #{tpu_custom_call.1} parent=5 // pred_check_branch
        %108 = sbr.rel (%p106) target = $region20
      $region19: #{tpu_custom_call.1} parent=5 // pred_region
        // Predicated region
        $region21: #{tpu_custom_call.1} parent=19 // pred_check
          %p109 = pneg %p34
        $region22: #{tpu_custom_call.1} parent=19 // pred_check_branch
          %111 = sbr.rel (%p109) target = $region24
        $region23: #{tpu_custom_call.1} parent=19 // pred_region
          %s112 = sand.u32 %s24, 1
          %s113 = scalar_lea.sflag [#allocation3], %s112
          %s114 = sand.u32 %s24, 1
          %s115 = smul.addr %s114, 8
          %s116 = scalar_lea.vmem [#allocation2], %s115
          %s118 = ssub.s32 128, 128
          %119 = vsyncadd %s113, %s118
          %s120 = smul.addr %s14, 128
          %s121 = scalar_lea.hbm %s0, %s120
          %s123 = sshll.u32 %s116, 4
          %s124 = int_to_ptr.vmem [resolvable:$true] %s123
          %126 = dma.hbm_to_vmem [thread:$0]  %s121, 128, %s124, %s113
        $region24: #{tpu_custom_call.1} parent=19 // pred_fallthru
          _
      $region20: #{tpu_custom_call.1} parent=5 // pred_fallthru
        _
      %p127 = scmp.le.s32.totalorder 1, %s14
      %p128 = scmp.lt.s32.totalorder %s14, 3
      %p129 = pnand %p127, %p128
      %p130 = pneg %p129
      // Predicated region
      $region25: #{tpu_custom_call.1} parent=5 // pred_check
        _
      $region26: #{tpu_custom_call.1} parent=5 // pred_check_branch
        %132 = sbr.rel (%p129) target = $region28
      $region27: #{tpu_custom_call.1} parent=5 // pred_region
        %s133 = ssub.s32 %s14, 1
        %s134 = sand.u32 %s27, 1
        %s135 = scalar_lea.sflag [#allocation3], %s134
        %s136 = sand.u32 %s27, 1
        %s137 = smul.addr %s136, 8
        %s138 = scalar_lea.vmem [#allocation2], %s137
        // Predicated region
        $region29: #{tpu_custom_call.1} parent=27 // pred_check
          %p139 = pneg %p40
        $region30: #{tpu_custom_call.1} parent=27 // pred_check_branch
          %141 = sbr.rel (%p139) target = $region32
        $region31: #{tpu_custom_call.1} parent=27 // pred_region
          %142 = dma.done %s135, 128
        $region32: #{tpu_custom_call.1} parent=27 // pred_fallthru
          _
        %s143 = sand.u32 %s27, 1
        %s144 = scalar_lea.sflag [#allocation3], %s143
        %s145 = sand.u32 %s27, 1
        %s146 = smul.addr %s145, 8
        %s147 = scalar_lea.vmem [#allocation2], %s146
        %p148 = pneg %p40
        %p149 = pneg %p37
        %p150 = pneg %p61
        %p151 = pneg %p58
        %p152 = pneg %p87
        %p153 = pneg %p84
        %s154 = sand.u32 %s74, 1
        %s155 = scalar_lea.sflag [#allocation4], %s154
        %s156 = sand.u32 %s74, 1
        %s157 = smul.addr %s156, 8
        %s158 = scalar_lea.vmem [#allocation5], %s157
        %v159 = vld [vmem:[%s1] sm:$0x1]
        %v160 = vadd.f32 %v159, 1.0
        %v161 = vld [vmem:[%s138] sm:$0xff]
        %v162 = vmul.f32 %v161, %v161
        %vm163 = vcmask 261120
        %v164 = vsel %vm163, %v162, 0.0
        %165 = vadd.xlane.f32.xlu0 %v164
        %v166 = vpop.xlane.xlu0 %165
        %v167 = vrcp.pop 32.0
        %v168 = vmul.f32 %v166, %v167
        %v169 = vadd.f32 %v168, 1e-06
        %v170 = vrsqrt.pop %v169
        %v171 = vmul.f32 %v161, %v170
        %v173 = vlaneseq
        %v174 = vshrl.u32 %v173, 7
        %v175 = vsub.s32 0, %v174
        %v176 = vrot.slane %v160, %v175
        %v178 = vmul.f32 %v171, %v176
        %179 = vst.msk [vmem:[%s158] sm:$0xff] %vm163, %v178
        %s180 = sand.u32 %s74, 1
        %s181 = scalar_lea.sflag [#allocation4], %s180
        %s182 = sand.u32 %s74, 1
        %s183 = smul.addr %s182, 8
        %s184 = scalar_lea.vmem [#allocation5], %s183
        // Predicated region
        $region33: #{tpu_custom_call.1} parent=27 // pred_check
          %p185 = pneg %p84
        $region34: #{tpu_custom_call.1} parent=27 // pred_check_branch
          %187 = sbr.rel (%p185) target = $region36
        $region35: #{tpu_custom_call.1} parent=27 // pred_region
          %s189 = ssub.s32 128, 128
          %190 = vsyncadd %s181, %s189
          %s191 = smul.addr %s19, 128
          %s192 = scalar_lea.hbm %s2, %s191
          %s194 = sshll.u32 %s184, 4
          %s195 = int_to_ptr.vmem [resolvable:$true] %s194
          %197 = dma.vmem_to_hbm [thread:$0]  %s195, 128, %s192, %s181
        $region36: #{tpu_custom_call.1} parent=27 // pred_fallthru
          _
      $region28: #{tpu_custom_call.1} parent=5 // pred_fallthru
        _
      %p198 = scmp.le.s32.totalorder 2, %s14
      // Predicated region
      $region37: #{tpu_custom_call.1} parent=5 // pred_check
        %p199 = pneg %p198
      $region38: #{tpu_custom_call.1} parent=5 // pred_check_branch
        %201 = sbr.rel (%p199) target = $region40
      $region39: #{tpu_custom_call.1} parent=5 // pred_region
        %s202 = ssub.s32 %s14, 2
        // Predicated region
        $region41: #{tpu_custom_call.1} parent=39 // pred_check
          %p203 = pneg %p90
        $region42: #{tpu_custom_call.1} parent=39 // pred_check_branch
          %205 = sbr.rel (%p203) target = $region44
        $region43: #{tpu_custom_call.1} parent=39 // pred_region
          %s206 = sand.u32 %s75, 1
          %s207 = scalar_lea.sflag [#allocation4], %s206
          %s208 = sand.u32 %s75, 1
          %s209 = smul.addr %s208, 8
          %s210 = scalar_lea.vmem [#allocation5], %s209
          %211 = dma.done %s207, 128
        $region44: #{tpu_custom_call.1} parent=39 // pred_fallthru
          _
      $region40: #{tpu_custom_call.1} parent=5 // pred_fallthru
        _
    $region6: #{tpu_custom_call.1} parent=1 // loop_footer
      %s18 = sadd.s32 1, %s14
    $region7: #{tpu_custom_call.1} parent=1 // loop_footer_branch
      %13 = sbr.rel target = $region3
    $region8: #{tpu_custom_call.1} parent=1 // loop_exit
      _
    %212 = vsyncpa [#allocation3], 1
    %s213 = scalar_lea.sflag [#allocation3], 1
    %214 = vsyncpa %s213, 1
    %215 = vsyncpa [#allocation4], 1
    %s216 = scalar_lea.sflag [#allocation4], 1
    %217 = vsyncpa %s216, 1

</llo_original>
